<compile_context>
chip_gen: v6e
topology: v6e:2x2x1
jax: 0.10.0
libtpu: 0.0.40
codegen_flags: <defaults>
</compile_context>

<pallas_src>
import jax
import jax.numpy as jnp
from jax.experimental import pallas as pl
from jax.experimental.pallas import tpu as pltpu


# Tile caps (f32): per-buffer tile <= 256 * 2048 * 4 B = 2 MiB. With default
# double-buffering on x and out that is ~8 MiB of VMEM, well under the scoped
# limit on v5e (16 MiB default), v6e (32 MiB) and v7x (64 MiB physical).
_ROW_TILE_CAP = 256      # multiple of 8   (sublane alignment)
_COL_TILE_CAP = 2048     # multiple of 128 (lane alignment)


def _pick_block(dim, cap):
    # Full extent if it fits under the cap (always a legal block shape),
    # otherwise the aligned cap with a cdiv grid (tail blocks are masked).
    return dim if dim <= cap else cap


def _injection_kernel(gamma_ref, prnu_ref, x_ref, o_ref):
    # 1x1 Conv2d(1 -> 1, no bias) applied to the PRNU map == scalar scale by
    # gamma. `scale` is only (1, TC) wide, so recomputing it per grid step is
    # negligible VPU work; the body is effectively one vmul per vreg of x.
    scale = 1.0 + gamma_ref[0] * prnu_ref[...]              # (1, TC)
    o_ref[...] = (x_ref[...] * scale).astype(o_ref.dtype)   # broadcast over rows


def multi_res_injection(x_unet, prnu_tensor, gamma):
    """x_unet: (N,C,H,W), prnu_tensor: (1,1,H,W), gamma: python float / 0-d array.

    Computes x_unet * (1 + gamma * prnu), prnu broadcast over N and C.
    """
    N, C, H, W = x_unet.shape
    rows, cols = N * C, H * W

    # Free layout plumbing (contiguous NCHW): make the last dim lane-dense
    # (H*W instead of W) so stores are unmasked and DMAs are wide.
    x2d = x_unet.reshape(rows, cols)
    prnu2d = prnu_tensor.reshape(1, cols)
    gamma_arr = jnp.asarray(gamma, jnp.float32).reshape(1)   # 1-D SMEM scalar

    tr = _pick_block(rows, _ROW_TILE_CAP)
    tc = _pick_block(cols, _COL_TILE_CAP)
    grid = (pl.cdiv(rows, tr), pl.cdiv(cols, tc))   # (row tiles, col tiles)

    # PRNU re-streaming across row tiles costs <= ~0.4% extra HBM traffic
    # (prnu is only H*W elements), so total traffic stays essentially at the
    # roofline minimum: read(x) + write(out) (+ one small prnu read per row tile).
    out2d = pl.pallas_call(
        _injection_kernel,
        out_shape=jax.ShapeDtypeStruct((rows, cols), x_unet.dtype),
        grid_spec=pltpu.PrefetchScalarGridSpec(
            num_scalar_prefetch=0,
            grid=grid,
            in_specs=[
                pl.BlockSpec(memory_space=pltpu.SMEM),        # gamma scalar (1,)
                pl.BlockSpec((1, tc), lambda i, j: (0, j)),   # prnu column tile
                pl.BlockSpec((tr, tc), lambda i, j: (i, j)),  # x tile
            ],
            out_specs=pl.BlockSpec((tr, tc), lambda i, j: (i, j)),
        ),
        compiler_params=pltpu.CompilerParams(
            # Leading row axis parallel -> megacore sharding on multi-TC chips;
            # column axis is the "changing" axis, kept last by convention.
            dimension_semantics=("parallel", "arbitrary"),
            # Explicit scoped-VMEM budget (worst case ~8 MiB of buffers).
            vmem_limit_bytes=32 * 1024 * 1024,
        ),
    )(gamma_arr, prnu2d, x2d)

    return out2d.reshape(N, C, H, W)


if __name__ == "__main__":
    key = jax.random.PRNGKey(0)
    k1, k2 = jax.random.split(key)

    N, C, H, W = 2, 4, 16, 16
    x = jax.random.normal(k1, (N, C, H, W), dtype=jnp.float32)
    prnu = jax.random.normal(k2, (1, 1, H, W), dtype=jnp.float32)

    # Deterministic parameter init: gamma_init path of the PyTorch module
    # (weight = ones_like(weight) * gamma_init for the 1x1 conv).
    gamma_init = 0.5

    # TODO(synk): `self.unet` is an externally injected submodule with no defined
    # architecture in this module; treated as identity for this synthetic kernel.
    x_unet = x

    out = multi_res_injection(x_unet, prnu, gamma_init)
    out = jax.block_until_ready(out)

    # Reference check (pure JAX).
    ref = x_unet * (1.0 + gamma_init * prnu)
    assert out.shape == (N, C, H, W)
    assert jnp.allclose(out, ref, atol=1e-6), "mismatch vs reference"

    print("KERNEL_OK")
</pallas_src>

<mosaic_0001>
module attributes {stable_mosaic.version = 11 : i64} {
  func.func @_injection_kernel(%arg0: i32, %arg1: i32, %arg2: memref<1xf32, #tpu.memory_space<smem>>, %arg3: memref<1x256xf32, #tpu.memory_space<vmem>>, %arg4: memref<8x256xf32, #tpu.memory_space<vmem>>, %arg5: memref<8x256xf32, #tpu.memory_space<vmem>>) attributes {dimension_semantics = [#tpu.dimension_semantics<parallel>, #tpu.dimension_semantics<arbitrary>], iteration_bounds = array<i64: 1, 1>, scalar_prefetch = 0 : i64, scratch_operands = 0 : i64, tpu.core_type = #tpu.core_type<tc>, window_params = [{transform_indices = @transform_0, window_bounds = array<i64: 1>}, {transform_indices = @transform_1, window_bounds = array<i64: 1, 256>}, {transform_indices = @transform_2, window_bounds = array<i64: 8, 256>}, {transform_indices = @transform_3, window_bounds = array<i64: 8, 256>}]} {
    %c0 = arith.constant 0 : index
    %0 = memref.load %arg2[%c0] : memref<1xf32, #tpu.memory_space<smem>>
    %c0_0 = arith.constant 0 : index
    %c0_1 = arith.constant 0 : index
    %1 = vector.load %arg3[%c0_0, %c0_1] : memref<1x256xf32, #tpu.memory_space<vmem>>, vector<1x256xf32>
    %2 = vector.broadcast %0 : f32 to vector<1x256xf32>
    %3 = arith.mulf %2, %1 : vector<1x256xf32>
    %cst = arith.constant 1.000000e+00 : f32
    %4 = vector.broadcast %cst : f32 to vector<1x256xf32>
    %5 = arith.addf %4, %3 : vector<1x256xf32>
    %c0_2 = arith.constant 0 : index
    %c0_3 = arith.constant 0 : index
    %6 = vector.load %arg4[%c0_2, %c0_3] : memref<8x256xf32, #tpu.memory_space<vmem>>, vector<8x256xf32>
    %7 = vector.broadcast %5 : vector<1x256xf32> to vector<8x256xf32>
    %8 = arith.mulf %6, %7 : vector<8x256xf32>
    %c0_4 = arith.constant 0 : index
    %c0_5 = arith.constant 0 : index
    %9 = vector.load %arg5[%c0_4, %c0_5] : memref<8x256xf32, #tpu.memory_space<vmem>>, vector<8x256xf32>
    tpu.vector_store %arg5[%c0_4, %c0_5], %8 {strides = array<i32>} : memref<8x256xf32, #tpu.memory_space<vmem>>, vector<8x256xf32>,
    return
  }
  func.func @transform_0(%arg0: i32, %arg1: i32) -> i32 {
    %c0_i32 = arith.constant 0 : i32
    %c0_i32_0 = arith.constant 0 : i32
    return %c0_i32 : i32
  }
  func.func @transform_1(%arg0: i32, %arg1: i32) -> (i32, i32) {
    %c0_i32 = arith.constant 0 : i32
    %c0_i32_0 = arith.constant 0 : i32
    return %c0_i32, %arg1 : i32, i32
  }
  func.func @transform_2(%arg0: i32, %arg1: i32) -> (i32, i32) {
    %c0_i32 = arith.constant 0 : i32
    return %arg0, %arg1 : i32, i32
  }
  func.func @transform_3(%arg0: i32, %arg1: i32) -> (i32, i32) {
    %c0_i32 = arith.constant 0 : i32
    return %arg0, %arg1 : i32, i32
  }
}

</mosaic_0001>

<llo_original>
// kernel: tpu_custom_call.1
$region0: #{tpu_custom_call.1}
  #allocation0 [shape = 'u32[]', space=smem, size = 0x4, offset = 0x4, fixed_abs, tag = 'smem constant byte address 0x4 - core index']
  #allocation1 [shape = 'u32[144,128]{1,0:T(1,128)}', space=vmem, size = 0x12000, scoped, tag = 'internal scratch']
  #allocation2 [shape = 'f32[1]{0:T(128)S(6)}', space=smem, size = 0x200, scoped, tag = 'scoped memory for tpu_custom_call.1']
  %s0 = inlined_call_operand.<no memory space> [shape: f32[1], index: 0, kind: input, shape index: {}]
  %s1 = inlined_call_operand.vmem [shape: f32[1,256], index: 1, kind: input, shape index: {}]
  %s2 = inlined_call_operand.hbm [shape: f32[8,256], index: 2, kind: input, shape index: {}]
  %s3 = inlined_call_operand.hbm [shape: f32[8,256], index: 3, kind: output, shape index: {}]
  %s4 = sld [smem:[#allocation0]]
  $region26: #{tpu_custom_call.1} parent=0
    _
  %s6 = ssub.s32 1, %s4
  %s7 = scalar_select 0, %s6, %s4
  %8 = sst [smem:[#allocation2]] %s0
  $region1: #{tpu_custom_call.1} parent=0
    #allocation3 [shape = 'u8[8192]{0}', space=vmem, size = 0x2000, scoped, tag = 'input window, operand 2, single buffered']
    #allocation4 [shape = 's32[1]{0}', space=sflag, size = 0x4, scoped, tag = 'scoped memory for tpu_custom_call.1']
    #allocation5 [shape = 's32[1]{0}', space=sflag, size = 0x4, scoped, tag = 'scoped memory for tpu_custom_call.1']
    #allocation6 [shape = 'u8[8192]{0}', space=vmem, size = 0x2000, scoped, tag = 'output window, operand 0, single buffered']
    %9 = vsyncpa [#allocation4], 0
    %10 = vsyncpa [#allocation5], 0
    // Predicated region
    $region2: #{tpu_custom_call.1} parent=1 // pred_check
      _
    $region3: #{tpu_custom_call.1} parent=1 // pred_check_branch
      %12 = sbr.rel (0) target = $region5
    $region4: #{tpu_custom_call.1} parent=1 // pred_region
      _
    $region5: #{tpu_custom_call.1} parent=1 // pred_fallthru
      _
    // Predicated region
    $region6: #{tpu_custom_call.1} parent=1 // pred_check
      _
    $region7: #{tpu_custom_call.1} parent=1 // pred_check_branch
      %14 = sbr.rel (0) target = $region9
    $region8: #{tpu_custom_call.1} parent=1 // pred_region
      _
    $region9: #{tpu_custom_call.1} parent=1 // pred_fallthru
      _
    // Predicated region
    $region10: #{tpu_custom_call.1} parent=1 // pred_check
      _
    $region11: #{tpu_custom_call.1} parent=1 // pred_check_branch
      %16 = sbr.rel (0) target = $region13
    $region12: #{tpu_custom_call.1} parent=1 // pred_region
      %s18 = ssub.s32 256, 256
      %19 = vsyncadd [#allocation4], %s18
      %s21 = sshll.u32 [#allocation3], 4
      %s22 = int_to_ptr.vmem [resolvable:$true] %s21
      %24 = dma.hbm_to_vmem [thread:$0]  %s2, 256, %s22, [#allocation4]
    $region13: #{tpu_custom_call.1} parent=1 // pred_fallthru
      _
    // Predicated region
    $region14: #{tpu_custom_call.1} parent=1 // pred_check
      _
    $region15: #{tpu_custom_call.1} parent=1 // pred_check_branch
      %26 = sbr.rel (0) target = $region17
    $region16: #{tpu_custom_call.1} parent=1 // pred_region
      %27 = dma.done [#allocation4], 256
    $region17: #{tpu_custom_call.1} parent=1 // pred_fallthru
      _
    %s28 = sld [smem:[#allocation2]]
    %v29 = vld [vmem:[%s1] sm:$0x3]
    %v30 = vstv %s28
    %v31 = vmul.f32 %v30, %v29
    %v32 = vadd.f32 %v31, 1.0
    %v33 = vld [vmem:[#allocation3] sm:$0xff]
    %v34 = vld [vmem:[#allocation3 + $0x8] sm:$0xff]
    %v36 = vlaneseq
    %v37 = vshrl.u32 %v36, 7
    %v38 = vsub.s32 0, %v37
    %v39 = vrot.slane %v32, %v38
    %v40 = vlaneseq
    %v41 = vshrl.u32 %v40, 7
    %v42 = vsub.s32 1, %v41
    %v43 = vrot.slane %v32, %v42
    %v46 = vmul.f32 %v33, %v39
    %v47 = vmul.f32 %v34, %v43
    %48 = vst [vmem:[#allocation6] sm:$0xff] %v46
    %49 = vst [vmem:[#allocation6 + $0x8] sm:$0xff] %v47
    // Predicated region
    $region18: #{tpu_custom_call.1} parent=1 // pred_check
      _
    $region19: #{tpu_custom_call.1} parent=1 // pred_check_branch
      %51 = sbr.rel (0) target = $region21
    $region20: #{tpu_custom_call.1} parent=1 // pred_region
      %s53 = ssub.s32 256, 256
      %54 = vsyncadd [#allocation5], %s53
      %s56 = sshll.u32 [#allocation6], 4
      %s57 = int_to_ptr.vmem [resolvable:$true] %s56
      %59 = dma.vmem_to_hbm [thread:$0]  %s57, 256, %s3, [#allocation5]
    $region21: #{tpu_custom_call.1} parent=1 // pred_fallthru
      _
    // Predicated region
    $region22: #{tpu_custom_call.1} parent=1 // pred_check
      _
    $region23: #{tpu_custom_call.1} parent=1 // pred_check_branch
      %61 = sbr.rel (0) target = $region25
    $region24: #{tpu_custom_call.1} parent=1 // pred_region
      %62 = dma.done [#allocation5], 256
    $region25: #{tpu_custom_call.1} parent=1 // pred_fallthru
      _
    %63 = vsyncpa [#allocation4], 1
    %64 = vsyncpa [#allocation5], 1

</llo_original>
